<compile_context>
chip_gen: v7x
topology: tpu7x:2x2x1
jax: 0.10.0
libtpu: 0.0.40
codegen_flags: <defaults>
</compile_context>

<pallas_src>
import functools

import jax
import jax.numpy as jnp
from jax import lax
from jax.experimental import pallas as pl
from jax.experimental.pallas import tpu as pltpu


def _logistic_kernel(x_ref, w_ref, b_ref, o_ref):
    # x_ref: [tb, d_in]    native-layout batch tile (streamed once from HBM)
    # w_ref: [d_out, d_in] VMEM-resident across the batch grid
    # b_ref: [d_out, 1]    VMEM-resident
    # o_ref: [d_out, tb]   batch on the lane axis -> lane-dense stores
    z = lax.dot_general(
        w_ref[...], x_ref[...],
        dimension_numbers=(((1,), (1,)), ((), ())),   # contract d_in with d_in
        preferred_element_type=jnp.float32,
    )                                                 # -> [d_out, tb]
    z = z + b_ref[...]                                # [d_out, 1] lane broadcast
    o_ref[...] = jax.nn.sigmoid(z).astype(o_ref.dtype)


def _round_up(n, m):
    return ((n + m - 1) // m) * m


def _pick_tile(B, cap=8192):
    """Single grid step when B fits; else ~cap-row tiles (multiple of 256) with
    an even tile count so v7x's two TensorCores both get work."""
    if B <= cap:
        return _round_up(B, 256)
    n = pl.cdiv(B, cap)
    n += n % 2                        # even tile count for 2-TC sharding
    return _round_up(pl.cdiv(B, n), 256)


@functools.partial(jax.jit, static_argnames=("tb", "out_dtype"))
def logistic_model(x, weight, bias, *, tb=None, out_dtype=jnp.float32):
    """sigmoid(x @ weight.T + bias); x:[B,d_in], weight:[d_out,d_in], bias:[d_out]."""
    B, d_in = x.shape
    d_out = weight.shape[0]

    if tb is None:
        tb = _pick_tile(B)
    n_tiles = pl.cdiv(B, tb)

    b_col = bias.astype(jnp.float32).reshape(d_out, 1)

    # VMEM budget: double-buffered x/y tiles + resident weight/bias + headroom,
    # capped at 48 MiB (below v7x's 64 MiB physical VMEM per TensorCore).
    in_item = jnp.dtype(x.dtype).itemsize
    out_item = jnp.dtype(out_dtype).itemsize
    needed = 2 * tb * (d_in * in_item + d_out * out_item) + d_out * (d_in * 4 + 4)
    vmem_limit = min(48 << 20, needed + (8 << 20))

    yT = pl.pallas_call(
        _logistic_kernel,
        out_shape=jax.ShapeDtypeStruct((d_out, B), out_dtype),
        grid=(n_tiles,),
        in_specs=[
            pl.BlockSpec((tb, d_in), lambda i: (i, 0)),      # x batch tile (native)
            pl.BlockSpec((d_out, d_in), lambda i: (0, 0)),   # weight, resident
            pl.BlockSpec((d_out, 1), lambda i: (0, 0)),      # bias, resident
        ],
        out_specs=pl.BlockSpec((d_out, tb), lambda i: (0, i)),
        compiler_params=pltpu.CompilerParams(
            dimension_semantics=("parallel",),
            vmem_limit_bytes=vmem_limit,
        ),
    )(x, weight, b_col)

    # Only remaining layout op; fuses with surrounding XLA under jit.
    return yT.T                                        # [B, d_out]


if __name__ == "__main__":
    key = jax.random.PRNGKey(0)
    kx, kw, kb = jax.random.split(key, 3)

    batch, input_dim, output_dim = 256, 32, 16

    x = jax.random.normal(kx, (batch, input_dim), dtype=jnp.float32)
    # Deterministic nn.Linear-style init: U(-1/sqrt(fan_in), 1/sqrt(fan_in))
    bound = 1.0 / (input_dim ** 0.5)
    weight = jax.random.uniform(kw, (output_dim, input_dim),
                                minval=-bound, maxval=bound, dtype=jnp.float32)
    bias = jax.random.uniform(kb, (output_dim,),
                              minval=-bound, maxval=bound, dtype=jnp.float32)

    y_ref = jax.nn.sigmoid(x @ weight.T + bias)

    # 1) Default path: tb = 256 -> grid=(1,) (per review, single step for B=256).
    y = logistic_model(x, weight, bias)
    jax.block_until_ready(y)
    assert y.shape == y_ref.shape
    assert jnp.allclose(y, y_ref, atol=5e-3, rtol=5e-3), \
        float(jnp.max(jnp.abs(y - y_ref)))

    # 2) Tiled + ragged path: B=200 with tb=128 -> grid=(2,), partial last block
    #    handled by the ceil-div grid (no explicit padding).
    x2 = x[:200]
    y2 = logistic_model(x2, weight, bias, tb=128)
    jax.block_until_ready(y2)
    assert jnp.allclose(y2, y_ref[:200], atol=5e-3, rtol=5e-3), \
        float(jnp.max(jnp.abs(y2 - y_ref[:200])))

    print("KERNEL_OK")
</pallas_src>

<mosaic_0001>
module attributes {stable_mosaic.version = 11 : i64} {
  func.func @_logistic_kernel(%arg0: i32, %arg1: memref<256x32xf32, #tpu.memory_space<vmem>>, %arg2: memref<16x32xf32, #tpu.memory_space<vmem>>, %arg3: memref<16x1xf32, #tpu.memory_space<vmem>>, %arg4: memref<16x256xf32, #tpu.memory_space<vmem>>) attributes {dimension_semantics = [#tpu.dimension_semantics<parallel>], iteration_bounds = array<i64: 1>, scalar_prefetch = 0 : i64, scratch_operands = 0 : i64, tpu.core_type = #tpu.core_type<tc>, window_params = [{transform_indices = @transform_0, window_bounds = array<i64: 256, 32>}, {pipeline_mode = #tpu.pipeline_mode<synchronous>, transform_indices = @transform_1, window_bounds = array<i64: 16, 32>}, {pipeline_mode = #tpu.pipeline_mode<synchronous>, transform_indices = @transform_2, window_bounds = array<i64: 16, 1>}, {transform_indices = @transform_3, window_bounds = array<i64: 16, 256>}]} {
    %c0 = arith.constant 0 : index
    %c0_0 = arith.constant 0 : index
    %0 = vector.load %arg2[%c0, %c0_0] : memref<16x32xf32, #tpu.memory_space<vmem>>, vector<16x32xf32>
    %c0_1 = arith.constant 0 : index
    %c0_2 = arith.constant 0 : index
    %1 = vector.load %arg1[%c0_1, %c0_2] : memref<256x32xf32, #tpu.memory_space<vmem>>, vector<256x32xf32>
    %cst = arith.constant dense<0.000000e+00> : vector<16x256xf32>
    %2 = tpu.matmul %0, %1, %cst {dimension_numbers = #tpu.dot_dimension_numbers<[1], [1], [0], [0], [0, 0, 1, 0], [], []>} : vector<16x32xf32>, vector<256x32xf32>, vector<16x256xf32> -> vector<16x256xf32>
    %c0_3 = arith.constant 0 : index
    %c0_4 = arith.constant 0 : index
    %3 = vector.load %arg3[%c0_3, %c0_4] : memref<16x1xf32, #tpu.memory_space<vmem>>, vector<16x1xf32>
    %4 = vector.broadcast %3 : vector<16x1xf32> to vector<16x256xf32>
    %5 = arith.addf %2, %4 : vector<16x256xf32>
    %6 = arith.negf %5 : vector<16x256xf32>
    %7 = math.exp %6 : vector<16x256xf32>
    %cst_5 = arith.constant 1.000000e+00 : f32
    %8 = vector.broadcast %cst_5 : f32 to vector<16x256xf32>
    %9 = arith.addf %8, %7 : vector<16x256xf32>
    %10 = arith.divf %8, %9 : vector<16x256xf32>
    %c0_6 = arith.constant 0 : index
    %c0_7 = arith.constant 0 : index
    %11 = vector.load %arg4[%c0_6, %c0_7] : memref<16x256xf32, #tpu.memory_space<vmem>>, vector<16x256xf32>
    tpu.vector_store %arg4[%c0_6, %c0_7], %10 {strides = array<i32>} : memref<16x256xf32, #tpu.memory_space<vmem>>, vector<16x256xf32>,
    return
  }
  func.func @transform_0(%arg0: i32) -> (i32, i32) {
    %c0_i32 = arith.constant 0 : i32
    %c0_i32_0 = arith.constant 0 : i32
    return %arg0, %c0_i32 : i32, i32
  }
  func.func @transform_1(%arg0: i32) -> (i32, i32) {
    %c0_i32 = arith.constant 0 : i32
    %c0_i32_0 = arith.constant 0 : i32
    %c0_i32_1 = arith.constant 0 : i32
    return %c0_i32, %c0_i32_0 : i32, i32
  }
  func.func @transform_2(%arg0: i32) -> (i32, i32) {
    %c0_i32 = arith.constant 0 : i32
    %c0_i32_0 = arith.constant 0 : i32
    %c0_i32_1 = arith.constant 0 : i32
    return %c0_i32, %c0_i32_0 : i32, i32
  }
  func.func @transform_3(%arg0: i32) -> (i32, i32) {
    %c0_i32 = arith.constant 0 : i32
    %c0_i32_0 = arith.constant 0 : i32
    return %c0_i32, %arg0 : i32, i32
  }
}

</mosaic_0001>

<llo_original>
// kernel: logistic_model.1
$region0: #{logistic_model.1}
  #allocation0 [shape = 'u32[]', space=smem, size = 0x4, offset = 0x4, fixed_abs, tag = 'smem constant byte address 0x4 - core index']
  #allocation1 [shape = 'u32[144,128]{1,0:T(1,128)}', space=vmem, size = 0x12000, scoped, tag = 'internal scratch']
  %s0 = inlined_call_operand.vmem [shape: f32[256,32], index: 0, kind: input, shape index: {}]
  %s1 = inlined_call_operand.vmem [shape: f32[16,32], index: 1, kind: input, shape index: {}]
  %s2 = inlined_call_operand.vmem [shape: f32[16,1], index: 2, kind: input, shape index: {}]
  %s3 = inlined_call_operand.hbm [shape: f32[16,256], index: 3, kind: output, shape index: {}]
  %s4 = sld [smem:[#allocation0]]
  $region22: #{logistic_model.1} parent=0
    _
  %s6 = ssub.s32 1, %s4
  %s7 = scalar_select 0, %s6, %s4
  $region1: #{logistic_model.1} parent=0
    #allocation2 [shape = 'u8[16384]{0}', space=vmem, size = 0x4000, scoped, tag = 'output window, operand 0, single buffered']
    #allocation3 [shape = 's32[1]{0}', space=sflag, size = 0x4, scoped, tag = 'scoped memory for logistic_model.1']
    %8 = vsyncpa [#allocation3], 0
    // Predicated region
    $region2: #{logistic_model.1} parent=1 // pred_check
      _
    $region3: #{logistic_model.1} parent=1 // pred_check_branch
      %10 = sbr.rel (0) target = $region5
    $region4: #{logistic_model.1} parent=1 // pred_region
      _
    $region5: #{logistic_model.1} parent=1 // pred_fallthru
      _
    // Predicated region
    $region6: #{logistic_model.1} parent=1 // pred_check
      _
    $region7: #{logistic_model.1} parent=1 // pred_check_branch
      %12 = sbr.rel (0) target = $region9
    $region8: #{logistic_model.1} parent=1 // pred_region
      _
    $region9: #{logistic_model.1} parent=1 // pred_fallthru
      _
    // Predicated region
    $region10: #{logistic_model.1} parent=1 // pred_check
      _
    $region11: #{logistic_model.1} parent=1 // pred_check_branch
      %14 = sbr.rel (0) target = $region13
    $region12: #{logistic_model.1} parent=1 // pred_region
      _
    $region13: #{logistic_model.1} parent=1 // pred_fallthru
      _
    %v15 = vld [vmem:[%s1] sm:$0xff]
    %v16 = vld [vmem:[%s1 + $0x8] sm:$0xff]
    %v17 = vld [vmem:[%s0] sm:$0xff]
    %v18 = vld [vmem:[%s0 + $0x8] sm:$0xff]
    %v19 = vld [vmem:[%s0 + $0x10] sm:$0xff]
    %v20 = vld [vmem:[%s0 + $0x18] sm:$0xff]
    %v21 = vld [vmem:[%s0 + $0x20] sm:$0xff]
    %v22 = vld [vmem:[%s0 + $0x28] sm:$0xff]
    %v23 = vld [vmem:[%s0 + $0x30] sm:$0xff]
    %v24 = vld [vmem:[%s0 + $0x38] sm:$0xff]
    %v25 = vld [vmem:[%s0 + $0x40] sm:$0xff]
    %v26 = vld [vmem:[%s0 + $0x48] sm:$0xff]
    %v27 = vld [vmem:[%s0 + $0x50] sm:$0xff]
    %v28 = vld [vmem:[%s0 + $0x58] sm:$0xff]
    %v29 = vld [vmem:[%s0 + $0x60] sm:$0xff]
    %v30 = vld [vmem:[%s0 + $0x68] sm:$0xff]
    %v31 = vld [vmem:[%s0 + $0x70] sm:$0xff]
    %v32 = vld [vmem:[%s0 + $0x78] sm:$0xff]
    %v33 = vld [vmem:[%s0 + $0x80] sm:$0xff]
    %v34 = vld [vmem:[%s0 + $0x88] sm:$0xff]
    %v35 = vld [vmem:[%s0 + $0x90] sm:$0xff]
    %v36 = vld [vmem:[%s0 + $0x98] sm:$0xff]
    %v37 = vld [vmem:[%s0 + $0xa0] sm:$0xff]
    %v38 = vld [vmem:[%s0 + $0xa8] sm:$0xff]
    %v39 = vld [vmem:[%s0 + $0xb0] sm:$0xff]
    %v40 = vld [vmem:[%s0 + $0xb8] sm:$0xff]
    %v41 = vld [vmem:[%s0 + $0xc0] sm:$0xff]
    %v42 = vld [vmem:[%s0 + $0xc8] sm:$0xff]
    %v43 = vld [vmem:[%s0 + $0xd0] sm:$0xff]
    %v44 = vld [vmem:[%s0 + $0xd8] sm:$0xff]
    %v45 = vld [vmem:[%s0 + $0xe0] sm:$0xff]
    %v46 = vld [vmem:[%s0 + $0xe8] sm:$0xff]
    %v47 = vld [vmem:[%s0 + $0xf0] sm:$0xff]
    %v48 = vld [vmem:[%s0 + $0xf8] sm:$0xff]
    %v49 = vld [vmem:[%s2] sm:$0xff]
    %v50 = vld [vmem:[%s2 + $0x8] sm:$0xff]
    %52 = vset.pattern.permute.xlu0 0
    %53 = vperm.xlu0 %52, %v49
    %v54 = vpop.permute.xlu0 %53
    %57 = vset.pattern.permute.xlu0 0
    %58 = vperm.xlu0 %57, %v50
    %v59 = vpop.permute.xlu0 %58
    %vm61 = vcmask 261120
    %v63 = vsel %vm61, %v15, 0
    %v66 = vsel %vm61, %v16, 0
    %v69 = vsel %vm61, %v17, 0
    %v72 = vsel %vm61, %v18, 0
    %v75 = vsel %vm61, %v19, 0
    %v78 = vsel %vm61, %v20, 0
    %v81 = vsel %vm61, %v21, 0
    %v84 = vsel %vm61, %v22, 0
    %v87 = vsel %vm61, %v23, 0
    %v90 = vsel %vm61, %v24, 0
    %v93 = vsel %vm61, %v25, 0
    %v96 = vsel %vm61, %v26, 0
    %v99 = vsel %vm61, %v27, 0
    %v102 = vsel %vm61, %v28, 0
    %v105 = vsel %vm61, %v29, 0
    %v108 = vsel %vm61, %v30, 0
    %v111 = vsel %vm61, %v31, 0
    %v114 = vsel %vm61, %v32, 0
    %v117 = vsel %vm61, %v33, 0
    %v120 = vsel %vm61, %v34, 0
    %v123 = vsel %vm61, %v35, 0
    %v126 = vsel %vm61, %v36, 0
    %v129 = vsel %vm61, %v37, 0
    %v132 = vsel %vm61, %v38, 0
    %v135 = vsel %vm61, %v39, 0
    %v138 = vsel %vm61, %v40, 0
    %v141 = vsel %vm61, %v41, 0
    %v144 = vsel %vm61, %v42, 0
    %v147 = vsel %vm61, %v43, 0
    %v150 = vsel %vm61, %v44, 0
    %v153 = vsel %vm61, %v45, 0
    %v156 = vsel %vm61, %v46, 0
    %v159 = vsel %vm61, %v47, 0
    %v162 = vsel %vm61, %v48, 0
    %164 = vmatprep.subr.mxu0 0.0
    %165 = vmatpush1.xpose.msra.mxu0 %v69
    %166 = vmatprep.subr.mxu0 0.0
    %167 = vmatpush1.xpose.msra.mxu0 %v72
    %168 = vmatprep.subr.mxu0 0.0
    %169 = vmatpush1.xpose.msra.mxu0 %v75
    %170 = vmatprep.subr.mxu0 0.0
    %171 = vmatpush1.xpose.msra.mxu0 %v78
    %172 = vmatprep.subr.mxu0 0.0
    %173 = vmatpush1.xpose.msra.mxu0 %v81
    %174 = vmatprep.subr.mxu0 0.0
    %175 = vmatpush1.xpose.msra.mxu0 %v84
    %176 = vmatprep.subr.mxu0 0.0
    %177 = vmatpush1.xpose.msra.mxu0 %v87
    %178 = vmatprep.subr.mxu0 0.0
    %179 = vmatpush1.xpose.msra.mxu0 %v90
    %180 = vmatprep.subr.mxu0 0.0
    %181 = vmatpush1.xpose.msra.mxu0 %v93
    %182 = vmatprep.subr.mxu0 0.0
    %183 = vmatpush1.xpose.msra.mxu0 %v96
    %184 = vmatprep.subr.mxu0 0.0
    %185 = vmatpush1.xpose.msra.mxu0 %v99
    %186 = vmatprep.subr.mxu0 0.0
    %187 = vmatpush1.xpose.msra.mxu0 %v102
    %188 = vmatprep.subr.mxu0 0.0
    %189 = vmatpush1.xpose.msra.mxu0 %v105
    %190 = vmatprep.subr.mxu0 0.0
    %191 = vmatpush1.xpose.msra.mxu0 %v108
    %192 = vmatprep.subr.mxu0 0.0
    %193 = vmatpush1.xpose.msra.mxu0 %v111
    %194 = vmatprep.subr.mxu0 0.0
    %195 = vmatpush1.xpose.msra.mxu0 %v114
    %196 = vmatprep.subr.mxu0 0.0
    %197 = vmatpush1.xpose.msra.mxu0 %v117
    %198 = vmatprep.subr.mxu0 0.0
    %199 = vmatpush1.xpose.msra.mxu0 %v120
    %200 = vmatprep.subr.mxu0 0.0
    %201 = vmatpush1.xpose.msra.mxu0 %v123
    %202 = vmatprep.subr.mxu0 0.0
    %203 = vmatpush1.xpose.msra.mxu0 %v126
    %204 = vmatprep.subr.mxu0 0.0
    %205 = vmatpush1.xpose.msra.mxu0 %v129
    %206 = vmatprep.subr.mxu0 0.0
    %207 = vmatpush1.xpose.msra.mxu0 %v132
    %208 = vmatprep.subr.mxu0 0.0
    %209 = vmatpush1.xpose.msra.mxu0 %v135
    %210 = vmatprep.subr.mxu0 0.0
    %211 = vmatpush1.xpose.msra.mxu0 %v138
    %212 = vmatprep.subr.mxu0 0.0
    %213 = vmatpush1.xpose.msra.mxu0 %v141
    %214 = vmatprep.subr.mxu0 0.0
    %215 = vmatpush1.xpose.msra.mxu0 %v144
    %216 = vmatprep.subr.mxu0 0.0
    %217 = vmatpush1.xpose.msra.mxu0 %v147
    %218 = vmatprep.subr.mxu0 0.0
    %219 = vmatpush1.xpose.msra.mxu0 %v150
    %220 = vmatprep.subr.mxu0 0.0
    %221 = vmatpush1.xpose.msra.mxu0 %v153
    %222 = vmatprep.subr.mxu0 0.0
    %223 = vmatpush1.xpose.msra.mxu0 %v156
    %224 = vmatprep.subr.mxu0 0.0
    %225 = vmatpush1.xpose.msra.mxu0 %v159
    %226 = vmatprep.subr.mxu0 0.0
    %227 = vmatpush1.xpose.msra.mxu0 %v162
    %228 = vmatprep.mubr.f32.mxu0 0.0
    %229 = vmatmul.mubr.f32.gmra.mrb[0].mxu0 %v63
    %v230 = vpop.f32.mrb[0].mxu0
    %v231 = vadd.f32 %v54, %v230
    %v232 = vpop.f32.mrb[0].mxu0
    %v233 = vadd.f32 %v54, %v232
    %234 = vmatprep.mubr.f32.mxu0 0.0
    %235 = vmatmul.mubr.f32.gmra.mrb[0].mxu0 %v66
    %v236 = vpop.f32.mrb[0].mxu0
    %v237 = vadd.f32 %v59, %v236
    %v238 = vpop.f32.mrb[0].mxu0
    %v239 = vadd.f32 %v59, %v238
    %240 = vdwg.mxu0
    %v241 = vxor.u32 %v231, 2147483648
    %v242 = vxor.u32 %v233, 2147483648
    %v243 = vxor.u32 %v237, 2147483648
    %v244 = vxor.u32 %v239, 2147483648
    %v245 = vmul.f32 %v241, 1.442695
    %v246 = vpow.pop %v245
    %v247 = vmul.f32 %v242, 1.442695
    %v248 = vpow.pop %v247
    %v249 = vmul.f32 %v243, 1.442695
    %v250 = vpow.pop %v249
    %v251 = vmul.f32 %v244, 1.442695
    %v252 = vpow.pop %v251
    %v253 = vadd.f32 %v246, 1.0
    %v254 = vadd.f32 %v248, 1.0
    %v255 = vadd.f32 %v250, 1.0
    %v256 = vadd.f32 %v252, 1.0
    %v257 = vrcp.pop %v253
    %v258 = vmul.f32 1.0, %v257
    %v259 = vrcp.pop %v254
    %v260 = vmul.f32 1.0, %v259
    %v261 = vrcp.pop %v255
    %v262 = vmul.f32 1.0, %v261
    %v263 = vrcp.pop %v256
    %v264 = vmul.f32 1.0, %v263
    %265 = vst [vmem:[#allocation2] sm:$0xff] %v258
    %266 = vst [vmem:[#allocation2 + $0x8] sm:$0xff] %v260
    %267 = vst [vmem:[#allocation2 + $0x10] sm:$0xff] %v262
    %268 = vst [vmem:[#allocation2 + $0x18] sm:$0xff] %v264
    // Predicated region
    $region14: #{logistic_model.1} parent=1 // pred_check
      _
    $region15: #{logistic_model.1} parent=1 // pred_check_branch
      %270 = sbr.rel (0) target = $region17
    $region16: #{logistic_model.1} parent=1 // pred_region
      %s272 = ssub.s32 512, 512
      %273 = vsyncadd [#allocation3], %s272
      %s274 = sshll.u32 [#allocation2], 4
      %s275 = int_to_ptr.vmem [resolvable:$true] %s274
      %280 = dma.vmem_to_hbm [thread:$0]  %s275, 512, %s3, [#allocation3], 256, 256, 16
    $region17: #{logistic_model.1} parent=1 // pred_fallthru
      _
    // Predicated region
    $region18: #{logistic_model.1} parent=1 // pred_check
      _
    $region19: #{logistic_model.1} parent=1 // pred_check_branch
      %282 = sbr.rel (0) target = $region21
    $region20: #{logistic_model.1} parent=1 // pred_region
      %283 = dma.done [#allocation3], 512
    $region21: #{logistic_model.1} parent=1 // pred_fallthru
      _
    %284 = vsyncpa [#allocation3], 1

</llo_original>
